<compile_context>
chip_gen: v6e
topology: v6e:2x2x1
jax: 0.10.0
libtpu: 0.0.40
codegen_flags: <defaults>
</compile_context>

<pallas_src>
import functools
import numpy as np
import jax
import jax.numpy as jnp
from jax import lax
from jax.experimental import pallas as pl
from jax.experimental.pallas import tpu as pltpu


# ----------------------------------------------------------------------------- kernel
def _ghost_kernel(x_ref, pw_ref, ps_ref, pb_ref, dw_ref, cs_ref, cb_ref,
                  hi_ref, wi_ref, out_ref, *, H, W, use_mxu):
    HW = H * W
    xb = x_ref[0]                                       # (Cin, H*W) f32, lane-dense

    # ---- primary 1x1 conv (+ folded BN + ReLU) --------------------------------
    if use_mxu:
        # pw_ref: (Ch, Cin).  Output (Ch, H*W) is lane-dense straight off the MXU.
        # TODO(synk): for very large Cin/Ch, cast operands to bf16 and pad Ch to 128.
        x1 = jnp.dot(pw_ref[...], xb, preferred_element_type=jnp.float32)
    else:
        # Tiny Cin: broadcast multiply-adds on the VPU (MXU would be pure latency).
        cin = xb.shape[0]
        x1 = xb[0:1, :] * pw_ref[0]                     # (1,HW)*(Ch,1) -> (Ch,HW)
        for i in range(1, cin):
            x1 = x1 + xb[i:i + 1, :] * pw_ref[i]
    x1 = jnp.maximum(x1 * ps_ref[...] + pb_ref[...], 0.0)

    # ---- cheap operation: depthwise 3x3 (+ folded BN + ReLU) ------------------
    # Neighbor (h+dy, w+dx) is a lane shift by s = dy*W + dx in the flattened
    # layout; zero padding is realized by masking lanes whose neighbor is
    # out of range (roll wrap-around is always masked).
    hi = hi_ref[...]                                    # (1, HW) row index per lane
    wi = wi_ref[...]                                    # (1, HW) col index per lane
    row_ok = {-1: hi >= 1, 0: None, 1: hi <= H - 2}     # hoisted base masks
    col_ok = {-1: wi >= 1, 0: None, 1: wi <= W - 2}

    acc = None
    for t in range(9):                                  # fully unrolled at trace time
        dy, dx = t // 3 - 1, t % 3 - 1
        s = dy * W + dx
        src = x1 if s == 0 else pltpu.roll(x1, (-s) % HW, axis=1)
        mask = row_ok[dy]
        if col_ok[dx] is not None:
            mask = col_ok[dx] if mask is None else (mask & col_ok[dx])
        if mask is not None:
            src = jnp.where(mask, src, 0.0)
        contrib = src * dw_ref[t]                       # (Ch,HW) * (Ch,1)
        acc = contrib if acc is None else acc + contrib
    x2 = jnp.maximum(acc * cs_ref[...] + cb_ref[...], 0.0)

    # ---- channel concat (sublanes), one dense full-lane store -----------------
    out_ref[0] = jnp.concatenate([x1, x2], axis=0)      # (oup, H*W)


# ----------------------------------------------------------------------------- wrapper
def ghost_module_pallas(x, params):
    """x: (N, Cin, H, W) float32 (NCHW, like PyTorch).  Returns (N, oup, H, W) f32."""
    N, Cin, H, W = x.shape
    HW = H * W
    pw = params['pw']                                   # (Cin, Ch)
    Ch = pw.shape[1]
    oup = params['oup']
    assert oup == 2 * Ch, "kernel supports ratio=2 with even oup"
    # TODO(synk): odd oup (PyTorch's out[:, :oup] slice), ratio != 2, stride != 1
    #             and dw_size != 3 are not implemented.

    f32 = jnp.float32
    use_mxu = Cin >= 32          # demo (Cin=4) takes the f32 VPU path

    x_flat = x.reshape(N, Cin, HW).astype(f32)          # NCHW -> lane-dense slabs

    if use_mxu:
        pw_arg = jnp.transpose(pw).astype(f32)          # (Ch, Cin) for jnp.dot
    else:
        pw_arg = pw.astype(f32).reshape(Cin, Ch, 1)     # per-input-channel columns

    lane = jnp.arange(HW, dtype=jnp.int32)
    weights = [
        pw_arg,
        params['p_scale'].astype(f32).reshape(Ch, 1),
        params['p_shift'].astype(f32).reshape(Ch, 1),
        params['dw'].astype(f32).reshape(9, Ch, 1),     # 3x3 depthwise taps
        params['c_scale'].astype(f32).reshape(Ch, 1),
        params['c_shift'].astype(f32).reshape(Ch, 1),
        (lane // W).reshape(1, HW),                     # row index per lane
        (lane % W).reshape(1, HW),                      # col index per lane
    ]

    def _const_spec(a):
        zeros = (0,) * a.ndim
        return pl.BlockSpec(a.shape, lambda b, _z=zeros: _z)

    grid_spec = pltpu.PrefetchScalarGridSpec(
        num_scalar_prefetch=0,
        grid=(N,),
        in_specs=[pl.BlockSpec((1, Cin, HW), lambda b: (b, 0, 0))]
                 + [_const_spec(w) for w in weights],
        out_specs=pl.BlockSpec((1, oup, HW), lambda b: (b, 0, 0)),
    )

    # Derived VMEM budget: double-buffered in/out blocks + resident weights + headroom.
    def _nbytes(a):
        return int(np.prod(a.shape)) * a.dtype.itemsize
    step_bytes = 2 * (Cin * HW * 4 + oup * HW * 4) + 2 * sum(_nbytes(w) for w in weights)
    vmem_limit = max(2 * step_bytes, 8 << 20)
    assert vmem_limit <= 64 * 1024 * 1024, "per-step footprint exceeds v7x VMEM"
    # TODO(synk): for large feature maps add a spatial (row-tile) grid axis with a
    #             1-row halo so per-step VMEM stays bounded and v7x megacore has work.

    kernel = functools.partial(_ghost_kernel, H=H, W=W, use_mxu=use_mxu)
    out = pl.pallas_call(
        kernel,
        grid_spec=grid_spec,
        out_shape=jax.ShapeDtypeStruct((N, oup, HW), f32),
        compiler_params=pltpu.CompilerParams(
            dimension_semantics=("parallel",),          # images independent
            vmem_limit_bytes=vmem_limit),
    )(x_flat, *weights)
    return out.reshape(N, oup, H, W)


# ----------------------------------------------------------------------------- params
def make_params(key, inp, oup, ratio=2, dw_size=3):
    assert ratio == 2 and dw_size == 3
    ch = -(-oup // ratio)                               # math.ceil(oup / ratio)
    keys = jax.random.split(key, 4)

    def folded_bn(k, n):                                # eval-mode BN -> scale/shift
        kw, kb, km, kv = jax.random.split(k, 4)
        w = 1.0 + 0.1 * jax.random.normal(kw, (n,), jnp.float32)
        b = 0.1 * jax.random.normal(kb, (n,), jnp.float32)
        m = 0.1 * jax.random.normal(km, (n,), jnp.float32)
        v = 1.0 + 0.1 * jnp.abs(jax.random.normal(kv, (n,), jnp.float32))
        scale = w / jnp.sqrt(v + 1e-5)
        return scale, b - m * scale

    pw = 0.3 * jax.random.normal(keys[0], (inp, ch), jnp.float32)    # 1x1 conv
    p_scale, p_shift = folded_bn(keys[1], ch)
    dw = 0.3 * jax.random.normal(keys[2], (3, 3, ch), jnp.float32)   # depthwise 3x3
    c_scale, c_shift = folded_bn(keys[3], ch)
    return dict(pw=pw, p_scale=p_scale, p_shift=p_shift,
                dw=dw, c_scale=c_scale, c_shift=c_shift, oup=oup)


# ----------------------------------------------------------------------------- pure-JAX reference (NCHW)
def ghost_module_ref(x, params):
    Cin, Ch = params['pw'].shape
    oup = params['oup']

    def conv(z, w, groups=1):
        return lax.conv_general_dilated(
            z, w, (1, 1), 'SAME',
            dimension_numbers=('NCHW', 'OIHW', 'NCHW'),
            feature_group_count=groups,
            precision=lax.Precision.HIGHEST)

    pw = jnp.transpose(params['pw']).reshape(Ch, Cin, 1, 1)          # OIHW
    x1 = jnp.maximum(conv(x, pw) * params['p_scale'][None, :, None, None]
                     + params['p_shift'][None, :, None, None], 0.0)
    dw = jnp.transpose(params['dw'], (2, 0, 1)).reshape(Ch, 1, 3, 3)  # OIHW, groups=Ch
    x2 = jnp.maximum(conv(x1, dw, groups=Ch) * params['c_scale'][None, :, None, None]
                     + params['c_shift'][None, :, None, None], 0.0)
    return jnp.concatenate([x1, x2], axis=1)[:, :oup]


# ----------------------------------------------------------------------------- main
if __name__ == "__main__":
    N, Cin, H, W = 2, 4, 16, 16
    OUP = 32                                            # GhostModule(inp=4, oup=32), defaults

    key = jax.random.PRNGKey(0)
    kx, kp = jax.random.split(key)
    x = jax.random.normal(kx, (N, Cin, H, W), jnp.float32)           # NCHW

    params = make_params(kp, Cin, OUP)

    out = ghost_module_pallas(x, params)
    jax.block_until_ready(out)

    ref = ghost_module_ref(x, params)
    np.testing.assert_allclose(np.asarray(out), np.asarray(ref), rtol=1e-4, atol=1e-4)

    print("KERNEL_OK")
</pallas_src>

<mosaic_0001>
module attributes {stable_mosaic.version = 11 : i64} {
  func.func @_ghost_kernel(%arg0: i32, %arg1: memref<1x4x256xf32, #tpu.memory_space<vmem>>, %arg2: memref<4x16x1xf32, #tpu.memory_space<vmem>>, %arg3: memref<16x1xf32, #tpu.memory_space<vmem>>, %arg4: memref<16x1xf32, #tpu.memory_space<vmem>>, %arg5: memref<9x16x1xf32, #tpu.memory_space<vmem>>, %arg6: memref<16x1xf32, #tpu.memory_space<vmem>>, %arg7: memref<16x1xf32, #tpu.memory_space<vmem>>, %arg8: memref<1x256xi32, #tpu.memory_space<vmem>>, %arg9: memref<1x256xi32, #tpu.memory_space<vmem>>, %arg10: memref<1x32x256xf32, #tpu.memory_space<vmem>>) attributes {dimension_semantics = [#tpu.dimension_semantics<parallel>], iteration_bounds = array<i64: 2>, scalar_prefetch = 0 : i64, scratch_operands = 0 : i64, tpu.core_type = #tpu.core_type<tc>, window_params = [{transform_indices = @transform_0, window_bounds = array<i64: 1, 4, 256>}, {pipeline_mode = #tpu.pipeline_mode<synchronous>, transform_indices = @transform_1, window_bounds = array<i64: 4, 16, 1>}, {pipeline_mode = #tpu.pipeline_mode<synchronous>, transform_indices = @transform_2, window_bounds = array<i64: 16, 1>}, {pipeline_mode = #tpu.pipeline_mode<synchronous>, transform_indices = @transform_3, window_bounds = array<i64: 16, 1>}, {pipeline_mode = #tpu.pipeline_mode<synchronous>, transform_indices = @transform_4, window_bounds = array<i64: 9, 16, 1>}, {pipeline_mode = #tpu.pipeline_mode<synchronous>, transform_indices = @transform_5, window_bounds = array<i64: 16, 1>}, {pipeline_mode = #tpu.pipeline_mode<synchronous>, transform_indices = @transform_6, window_bounds = array<i64: 16, 1>}, {pipeline_mode = #tpu.pipeline_mode<synchronous>, transform_indices = @transform_7, window_bounds = array<i64: 1, 256>}, {pipeline_mode = #tpu.pipeline_mode<synchronous>, transform_indices = @transform_8, window_bounds = array<i64: 1, 256>}, {transform_indices = @transform_9, window_bounds = array<i64: 1, 32, 256>}]} {
    %c0 = arith.constant 0 : index
    %c0_0 = arith.constant 0 : index
    %c0_1 = arith.constant 0 : index
    %0 = vector.load %arg1[%c0, %c0_0, %c0_1] : memref<1x4x256xf32, #tpu.memory_space<vmem>>, vector<1x4x256xf32>
    %1 = vector.shape_cast %0 : vector<1x4x256xf32> to vector<4x256xf32>
    %2 = vector.extract_strided_slice %1 {offsets = [0, 0], sizes = [1, 256], strides = [1, 1]} : vector<4x256xf32> to vector<1x256xf32>
    %c0_2 = arith.constant 0 : index
    %c0_3 = arith.constant 0 : index
    %c0_4 = arith.constant 0 : index
    %3 = vector.load %arg2[%c0_2, %c0_3, %c0_4] : memref<4x16x1xf32, #tpu.memory_space<vmem>>, vector<1x16x1xf32>
    %4 = vector.shape_cast %3 : vector<1x16x1xf32> to vector<16x1xf32>
    %5 = vector.broadcast %2 : vector<1x256xf32> to vector<16x256xf32>
    %6 = vector.broadcast %4 : vector<16x1xf32> to vector<16x256xf32>
    %7 = arith.mulf %5, %6 : vector<16x256xf32>
    %8 = vector.extract_strided_slice %1 {offsets = [1, 0], sizes = [1, 256], strides = [1, 1]} : vector<4x256xf32> to vector<1x256xf32>
    %c1 = arith.constant 1 : index
    %c0_5 = arith.constant 0 : index
    %c0_6 = arith.constant 0 : index
    %9 = vector.load %arg2[%c1, %c0_5, %c0_6] : memref<4x16x1xf32, #tpu.memory_space<vmem>>, vector<1x16x1xf32>
    %10 = vector.shape_cast %9 : vector<1x16x1xf32> to vector<16x1xf32>
    %11 = vector.broadcast %8 : vector<1x256xf32> to vector<16x256xf32>
    %12 = vector.broadcast %10 : vector<16x1xf32> to vector<16x256xf32>
    %13 = arith.mulf %11, %12 : vector<16x256xf32>
    %14 = arith.addf %7, %13 : vector<16x256xf32>
    %15 = vector.extract_strided_slice %1 {offsets = [2, 0], sizes = [1, 256], strides = [1, 1]} : vector<4x256xf32> to vector<1x256xf32>
    %c2 = arith.constant 2 : index
    %c0_7 = arith.constant 0 : index
    %c0_8 = arith.constant 0 : index
    %16 = vector.load %arg2[%c2, %c0_7, %c0_8] : memref<4x16x1xf32, #tpu.memory_space<vmem>>, vector<1x16x1xf32>
    %17 = vector.shape_cast %16 : vector<1x16x1xf32> to vector<16x1xf32>
    %18 = vector.broadcast %15 : vector<1x256xf32> to vector<16x256xf32>
    %19 = vector.broadcast %17 : vector<16x1xf32> to vector<16x256xf32>
    %20 = arith.mulf %18, %19 : vector<16x256xf32>
    %21 = arith.addf %14, %20 : vector<16x256xf32>
    %22 = vector.extract_strided_slice %1 {offsets = [3, 0], sizes = [1, 256], strides = [1, 1]} : vector<4x256xf32> to vector<1x256xf32>
    %c3 = arith.constant 3 : index
    %c0_9 = arith.constant 0 : index
    %c0_10 = arith.constant 0 : index
    %23 = vector.load %arg2[%c3, %c0_9, %c0_10] : memref<4x16x1xf32, #tpu.memory_space<vmem>>, vector<1x16x1xf32>
    %24 = vector.shape_cast %23 : vector<1x16x1xf32> to vector<16x1xf32>
    %25 = vector.broadcast %22 : vector<1x256xf32> to vector<16x256xf32>
    %26 = vector.broadcast %24 : vector<16x1xf32> to vector<16x256xf32>
    %27 = arith.mulf %25, %26 : vector<16x256xf32>
    %28 = arith.addf %21, %27 : vector<16x256xf32>
    %c0_11 = arith.constant 0 : index
    %c0_12 = arith.constant 0 : index
    %29 = vector.load %arg3[%c0_11, %c0_12] : memref<16x1xf32, #tpu.memory_space<vmem>>, vector<16x1xf32>
    %30 = vector.broadcast %29 : vector<16x1xf32> to vector<16x256xf32>
    %31 = arith.mulf %28, %30 : vector<16x256xf32>
    %c0_13 = arith.constant 0 : index
    %c0_14 = arith.constant 0 : index
    %32 = vector.load %arg4[%c0_13, %c0_14] : memref<16x1xf32, #tpu.memory_space<vmem>>, vector<16x1xf32>
    %33 = vector.broadcast %32 : vector<16x1xf32> to vector<16x256xf32>
    %34 = arith.addf %31, %33 : vector<16x256xf32>
    %cst = arith.constant 0.000000e+00 : f32
    %35 = vector.broadcast %cst : f32 to vector<16x256xf32>
    %36 = arith.maximumf %34, %35 : vector<16x256xf32>
    %c0_15 = arith.constant 0 : index
    %c0_16 = arith.constant 0 : index
    %37 = vector.load %arg8[%c0_15, %c0_16] : memref<1x256xi32, #tpu.memory_space<vmem>>, vector<1x256xi32>
    %c0_17 = arith.constant 0 : index
    %c0_18 = arith.constant 0 : index
    %38 = vector.load %arg9[%c0_17, %c0_18] : memref<1x256xi32, #tpu.memory_space<vmem>>, vector<1x256xi32>
    %c1_i32 = arith.constant 1 : i32
    %39 = vector.broadcast %c1_i32 : i32 to vector<1x256xi32>
    %40 = arith.cmpi sge, %37, %39 : vector<1x256xi32>
    %c14_i32 = arith.constant 14 : i32
    %41 = vector.broadcast %c14_i32 : i32 to vector<1x256xi32>
    %42 = arith.cmpi sle, %37, %41 : vector<1x256xi32>
    %c1_i32_19 = arith.constant 1 : i32
    %43 = vector.broadcast %c1_i32_19 : i32 to vector<1x256xi32>
    %44 = arith.cmpi sge, %38, %43 : vector<1x256xi32>
    %c14_i32_20 = arith.constant 14 : i32
    %45 = vector.broadcast %c14_i32_20 : i32 to vector<1x256xi32>
    %46 = arith.cmpi sle, %38, %45 : vector<1x256xi32>
    %c17_i32 = arith.constant 17 : i32
    %47 = tpu.dynamic_rotate %36 by %c17_i32 dim 1 : vector<16x256xf32>, i32 -> vector<16x256xf32>
    %48 = arith.andi %40, %44 : vector<1x256xi1>
    %cst_21 = arith.constant 0.000000e+00 : f32
    %49 = vector.shape_cast %48 : vector<1x256xi1> to vector<1x256xi1>
    %50 = vector.broadcast %49 : vector<1x256xi1> to vector<16x256xi1>
    %51 = vector.broadcast %cst_21 : f32 to vector<16x256xf32>
    %52 = arith.select %50, %47, %51 : vector<16x256xi1>, vector<16x256xf32>
    %c0_22 = arith.constant 0 : index
    %c0_23 = arith.constant 0 : index
    %c0_24 = arith.constant 0 : index
    %53 = vector.load %arg5[%c0_22, %c0_23, %c0_24] : memref<9x16x1xf32, #tpu.memory_space<vmem>>, vector<1x16x1xf32>
    %54 = vector.shape_cast %53 : vector<1x16x1xf32> to vector<16x1xf32>
    %55 = vector.broadcast %54 : vector<16x1xf32> to vector<16x256xf32>
    %56 = arith.mulf %52, %55 : vector<16x256xf32>
    %c16_i32 = arith.constant 16 : i32
    %57 = tpu.dynamic_rotate %36 by %c16_i32 dim 1 : vector<16x256xf32>, i32 -> vector<16x256xf32>
    %cst_25 = arith.constant 0.000000e+00 : f32
    %58 = vector.shape_cast %40 : vector<1x256xi1> to vector<1x256xi1>
    %59 = vector.broadcast %58 : vector<1x256xi1> to vector<16x256xi1>
    %60 = vector.broadcast %cst_25 : f32 to vector<16x256xf32>
    %61 = arith.select %59, %57, %60 : vector<16x256xi1>, vector<16x256xf32>
    %c1_26 = arith.constant 1 : index
    %c0_27 = arith.constant 0 : index
    %c0_28 = arith.constant 0 : index
    %62 = vector.load %arg5[%c1_26, %c0_27, %c0_28] : memref<9x16x1xf32, #tpu.memory_space<vmem>>, vector<1x16x1xf32>
    %63 = vector.shape_cast %62 : vector<1x16x1xf32> to vector<16x1xf32>
    %64 = vector.broadcast %63 : vector<16x1xf32> to vector<16x256xf32>
    %65 = arith.mulf %61, %64 : vector<16x256xf32>
    %66 = arith.addf %56, %65 : vector<16x256xf32>
    %c15_i32 = arith.constant 15 : i32
    %67 = tpu.dynamic_rotate %36 by %c15_i32 dim 1 : vector<16x256xf32>, i32 -> vector<16x256xf32>
    %68 = arith.andi %40, %46 : vector<1x256xi1>
    %cst_29 = arith.constant 0.000000e+00 : f32
    %69 = vector.shape_cast %68 : vector<1x256xi1> to vector<1x256xi1>
    %70 = vector.broadcast %69 : vector<1x256xi1> to vector<16x256xi1>
    %71 = vector.broadcast %cst_29 : f32 to vector<16x256xf32>
    %72 = arith.select %70, %67, %71 : vector<16x256xi1>, vector<16x256xf32>
    %c2_30 = arith.constant 2 : index
    %c0_31 = arith.constant 0 : index
    %c0_32 = arith.constant 0 : index
    %73 = vector.load %arg5[%c2_30, %c0_31, %c0_32] : memref<9x16x1xf32, #tpu.memory_space<vmem>>, vector<1x16x1xf32>
    %74 = vector.shape_cast %73 : vector<1x16x1xf32> to vector<16x1xf32>
    %75 = vector.broadcast %74 : vector<16x1xf32> to vector<16x256xf32>
    %76 = arith.mulf %72, %75 : vector<16x256xf32>
    %77 = arith.addf %66, %76 : vector<16x256xf32>
    %c1_i32_33 = arith.constant 1 : i32
    %78 = tpu.dynamic_rotate %36 by %c1_i32_33 dim 1 : vector<16x256xf32>, i32 -> vector<16x256xf32>
    %cst_34 = arith.constant 0.000000e+00 : f32
    %79 = vector.shape_cast %44 : vector<1x256xi1> to vector<1x256xi1>
    %80 = vector.broadcast %79 : vector<1x256xi1> to vector<16x256xi1>
    %81 = vector.broadcast %cst_34 : f32 to vector<16x256xf32>
    %82 = arith.select %80, %78, %81 : vector<16x256xi1>, vector<16x256xf32>
    %c3_35 = arith.constant 3 : index
    %c0_36 = arith.constant 0 : index
    %c0_37 = arith.constant 0 : index
    %83 = vector.load %arg5[%c3_35, %c0_36, %c0_37] : memref<9x16x1xf32, #tpu.memory_space<vmem>>, vector<1x16x1xf32>
    %84 = vector.shape_cast %83 : vector<1x16x1xf32> to vector<16x1xf32>
    %85 = vector.broadcast %84 : vector<16x1xf32> to vector<16x256xf32>
    %86 = arith.mulf %82, %85 : vector<16x256xf32>
    %87 = arith.addf %77, %86 : vector<16x256xf32>
    %c4 = arith.constant 4 : index
    %c0_38 = arith.constant 0 : index
    %c0_39 = arith.constant 0 : index
    %88 = vector.load %arg5[%c4, %c0_38, %c0_39] : memref<9x16x1xf32, #tpu.memory_space<vmem>>, vector<1x16x1xf32>
    %89 = vector.shape_cast %88 : vector<1x16x1xf32> to vector<16x1xf32>
    %90 = vector.broadcast %89 : vector<16x1xf32> to vector<16x256xf32>
    %91 = arith.mulf %36, %90 : vector<16x256xf32>
    %92 = arith.addf %87, %91 : vector<16x256xf32>
    %c255_i32 = arith.constant 255 : i32
    %93 = tpu.dynamic_rotate %36 by %c255_i32 dim 1 : vector<16x256xf32>, i32 -> vector<16x256xf32>
    %cst_40 = arith.constant 0.000000e+00 : f32
    %94 = vector.shape_cast %46 : vector<1x256xi1> to vector<1x256xi1>
    %95 = vector.broadcast %94 : vector<1x256xi1> to vector<16x256xi1>
    %96 = vector.broadcast %cst_40 : f32 to vector<16x256xf32>
    %97 = arith.select %95, %93, %96 : vector<16x256xi1>, vector<16x256xf32>
    %c5 = arith.constant 5 : index
    %c0_41 = arith.constant 0 : index
    %c0_42 = arith.constant 0 : index
    %98 = vector.load %arg5[%c5, %c0_41, %c0_42] : memref<9x16x1xf32, #tpu.memory_space<vmem>>, vector<1x16x1xf32>
    %99 = vector.shape_cast %98 : vector<1x16x1xf32> to vector<16x1xf32>
    %100 = vector.broadcast %99 : vector<16x1xf32> to vector<16x256xf32>
    %101 = arith.mulf %97, %100 : vector<16x256xf32>
    %102 = arith.addf %92, %101 : vector<16x256xf32>
    %c241_i32 = arith.constant 241 : i32
    %103 = tpu.dynamic_rotate %36 by %c241_i32 dim 1 : vector<16x256xf32>, i32 -> vector<16x256xf32>
    %104 = arith.andi %42, %44 : vector<1x256xi1>
    %cst_43 = arith.constant 0.000000e+00 : f32
    %105 = vector.shape_cast %104 : vector<1x256xi1> to vector<1x256xi1>
    %106 = vector.broadcast %105 : vector<1x256xi1> to vector<16x256xi1>
    %107 = vector.broadcast %cst_43 : f32 to vector<16x256xf32>
    %108 = arith.select %106, %103, %107 : vector<16x256xi1>, vector<16x256xf32>
    %c6 = arith.constant 6 : index
    %c0_44 = arith.constant 0 : index
    %c0_45 = arith.constant 0 : index
    %109 = vector.load %arg5[%c6, %c0_44, %c0_45] : memref<9x16x1xf32, #tpu.memory_space<vmem>>, vector<1x16x1xf32>
    %110 = vector.shape_cast %109 : vector<1x16x1xf32> to vector<16x1xf32>
    %111 = vector.broadcast %110 : vector<16x1xf32> to vector<16x256xf32>
    %112 = arith.mulf %108, %111 : vector<16x256xf32>
    %113 = arith.addf %102, %112 : vector<16x256xf32>
    %c240_i32 = arith.constant 240 : i32
    %114 = tpu.dynamic_rotate %36 by %c240_i32 dim 1 : vector<16x256xf32>, i32 -> vector<16x256xf32>
    %cst_46 = arith.constant 0.000000e+00 : f32
    %115 = vector.shape_cast %42 : vector<1x256xi1> to vector<1x256xi1>
    %116 = vector.broadcast %115 : vector<1x256xi1> to vector<16x256xi1>
    %117 = vector.broadcast %cst_46 : f32 to vector<16x256xf32>
    %118 = arith.select %116, %114, %117 : vector<16x256xi1>, vector<16x256xf32>
    %c7 = arith.constant 7 : index
    %c0_47 = arith.constant 0 : index
    %c0_48 = arith.constant 0 : index
    %119 = vector.load %arg5[%c7, %c0_47, %c0_48] : memref<9x16x1xf32, #tpu.memory_space<vmem>>, vector<1x16x1xf32>
    %120 = vector.shape_cast %119 : vector<1x16x1xf32> to vector<16x1xf32>
    %121 = vector.broadcast %120 : vector<16x1xf32> to vector<16x256xf32>
    %122 = arith.mulf %118, %121 : vector<16x256xf32>
    %123 = arith.addf %113, %122 : vector<16x256xf32>
    %c239_i32 = arith.constant 239 : i32
    %124 = tpu.dynamic_rotate %36 by %c239_i32 dim 1 : vector<16x256xf32>, i32 -> vector<16x256xf32>
    %125 = arith.andi %42, %46 : vector<1x256xi1>
    %cst_49 = arith.constant 0.000000e+00 : f32
    %126 = vector.shape_cast %125 : vector<1x256xi1> to vector<1x256xi1>
    %127 = vector.broadcast %126 : vector<1x256xi1> to vector<16x256xi1>
    %128 = vector.broadcast %cst_49 : f32 to vector<16x256xf32>
    %129 = arith.select %127, %124, %128 : vector<16x256xi1>, vector<16x256xf32>
    %c8 = arith.constant 8 : index
    %c0_50 = arith.constant 0 : index
    %c0_51 = arith.constant 0 : index
    %130 = vector.load %arg5[%c8, %c0_50, %c0_51] : memref<9x16x1xf32, #tpu.memory_space<vmem>>, vector<1x16x1xf32>
    %131 = vector.shape_cast %130 : vector<1x16x1xf32> to vector<16x1xf32>
    %132 = vector.broadcast %131 : vector<16x1xf32> to vector<16x256xf32>
    %133 = arith.mulf %129, %132 : vector<16x256xf32>
    %134 = arith.addf %123, %133 : vector<16x256xf32>
    %c0_52 = arith.constant 0 : index
    %c0_53 = arith.constant 0 : index
    %135 = vector.load %arg6[%c0_52, %c0_53] : memref<16x1xf32, #tpu.memory_space<vmem>>, vector<16x1xf32>
    %136 = vector.broadcast %135 : vector<16x1xf32> to vector<16x256xf32>
    %137 = arith.mulf %134, %136 : vector<16x256xf32>
    %c0_54 = arith.constant 0 : index
    %c0_55 = arith.constant 0 : index
    %138 = vector.load %arg7[%c0_54, %c0_55] : memref<16x1xf32, #tpu.memory_space<vmem>>, vector<16x1xf32>
    %139 = vector.broadcast %138 : vector<16x1xf32> to vector<16x256xf32>
    %140 = arith.addf %137, %139 : vector<16x256xf32>
    %cst_56 = arith.constant 0.000000e+00 : f32
    %141 = vector.broadcast %cst_56 : f32 to vector<16x256xf32>
    %142 = arith.maximumf %140, %141 : vector<16x256xf32>
    %143 = tpu.concatenate %36, %142 in 0 : vector<16x256xf32>, vector<16x256xf32> -> vector<32x256xf32>
    %c0_57 = arith.constant 0 : index
    %c0_58 = arith.constant 0 : index
    %c0_59 = arith.constant 0 : index
    %144 = vector.load %arg10[%c0_57, %c0_58, %c0_59] : memref<1x32x256xf32, #tpu.memory_space<vmem>>, vector<1x32x256xf32>
    %145 = vector.shape_cast %144 : vector<1x32x256xf32> to vector<32x256xf32>
    %146 = vector.shape_cast %143 : vector<32x256xf32> to vector<1x32x256xf32>
    tpu.vector_store %arg10[%c0_57, %c0_58, %c0_59], %146 {strides = array<i32>} : memref<1x32x256xf32, #tpu.memory_space<vmem>>, vector<1x32x256xf32>,
    return
  }
  func.func @transform_0(%arg0: i32) -> (i32, i32, i32) {
    %c0_i32 = arith.constant 0 : i32
    %c0_i32_0 = arith.constant 0 : i32
    %c0_i32_1 = arith.constant 0 : i32
    return %arg0, %c0_i32, %c0_i32_0 : i32, i32, i32
  }
  func.func @transform_1(%arg0: i32) -> (i32, i32, i32) {
    %c0_i32 = arith.constant 0 : i32
    %c0_i32_0 = arith.constant 0 : i32
    %c0_i32_1 = arith.constant 0 : i32
    %c0_i32_2 = arith.constant 0 : i32
    return %c0_i32, %c0_i32_0, %c0_i32_1 : i32, i32, i32
  }
  func.func @transform_2(%arg0: i32) -> (i32, i32) {
    %c0_i32 = arith.constant 0 : i32
    %c0_i32_0 = arith.constant 0 : i32
    %c0_i32_1 = arith.constant 0 : i32
    return %c0_i32, %c0_i32_0 : i32, i32
  }
  func.func @transform_3(%arg0: i32) -> (i32, i32) {
    %c0_i32 = arith.constant 0 : i32
    %c0_i32_0 = arith.constant 0 : i32
    %c0_i32_1 = arith.constant 0 : i32
    return %c0_i32, %c0_i32_0 : i32, i32
  }
  func.func @transform_4(%arg0: i32) -> (i32, i32, i32) {
    %c0_i32 = arith.constant 0 : i32
    %c0_i32_0 = arith.constant 0 : i32
    %c0_i32_1 = arith.constant 0 : i32
    %c0_i32_2 = arith.constant 0 : i32
    return %c0_i32, %c0_i32_0, %c0_i32_1 : i32, i32, i32
  }
  func.func @transform_5(%arg0: i32) -> (i32, i32) {
    %c0_i32 = arith.constant 0 : i32
    %c0_i32_0 = arith.constant 0 : i32
    %c0_i32_1 = arith.constant 0 : i32
    return %c0_i32, %c0_i32_0 : i32, i32
  }
  func.func @transform_6(%arg0: i32) -> (i32, i32) {
    %c0_i32 = arith.constant 0 : i32
    %c0_i32_0 = arith.constant 0 : i32
    %c0_i32_1 = arith.constant 0 : i32
    return %c0_i32, %c0_i32_0 : i32, i32
  }
  func.func @transform_7(%arg0: i32) -> (i32, i32) {
    %c0_i32 = arith.constant 0 : i32
    %c0_i32_0 = arith.constant 0 : i32
    %c0_i32_1 = arith.constant 0 : i32
    return %c0_i32, %c0_i32_0 : i32, i32
  }
  func.func @transform_8(%arg0: i32) -> (i32, i32) {
    %c0_i32 = arith.constant 0 : i32
    %c0_i32_0 = arith.constant 0 : i32
    %c0_i32_1 = arith.constant 0 : i32
    return %c0_i32, %c0_i32_0 : i32, i32
  }
  func.func @transform_9(%arg0: i32) -> (i32, i32, i32) {
    %c0_i32 = arith.constant 0 : i32
    %c0_i32_0 = arith.constant 0 : i32
    %c0_i32_1 = arith.constant 0 : i32
    return %arg0, %c0_i32, %c0_i32_0 : i32, i32, i32
  }
}

</mosaic_0001>

<llo_original>
// kernel: tpu_custom_call.1
$region0: #{tpu_custom_call.1}
  #allocation0 [shape = 'u32[]', space=smem, size = 0x4, offset = 0x4, fixed_abs, tag = 'smem constant byte address 0x4 - core index']
  #allocation1 [shape = 'u32[144,128]{1,0:T(1,128)}', space=vmem, size = 0x12000, scoped, tag = 'internal scratch']
  %s0 = inlined_call_operand.vmem [shape: f32[2,4,256], index: 0, kind: input, shape index: {}]
  %s1 = inlined_call_operand.vmem [shape: f32[4,16,1], index: 1, kind: input, shape index: {}]
  %s2 = inlined_call_operand.vmem [shape: f32[16,1], index: 2, kind: input, shape index: {}]
  %s3 = inlined_call_operand.vmem [shape: f32[16,1], index: 3, kind: input, shape index: {}]
  %s4 = inlined_call_operand.vmem [shape: f32[9,16,1], index: 4, kind: input, shape index: {}]
  %s5 = inlined_call_operand.vmem [shape: f32[16,1], index: 5, kind: input, shape index: {}]
  %s6 = inlined_call_operand.vmem [shape: f32[16,1], index: 6, kind: input, shape index: {}]
  %s7 = inlined_call_operand.vmem [shape: s32[1,256], index: 7, kind: input, shape index: {}]
  %s8 = inlined_call_operand.vmem [shape: s32[1,256], index: 8, kind: input, shape index: {}]
  %s9 = inlined_call_operand.hbm [shape: f32[2,32,256], index: 9, kind: output, shape index: {}]
  %s10 = sld [smem:[#allocation0]]
  $region69: #{tpu_custom_call.1} parent=0
    _
  %s12 = ssub.s32 1, %s10
  %s13 = scalar_select 0, %s12, %s10
  $region1: #{tpu_custom_call.1} parent=0
    #allocation2 [shape = 'u8[65536]{0}', space=vmem, size = 0x10000, scoped, tag = 'output window, operand 0']
    #allocation3 [shape = 's32[2]{0}', space=sflag, size = 0x8, scoped, tag = 'scoped memory for tpu_custom_call.1']
    %14 = vsyncpa [#allocation3], 0
    %s15 = scalar_lea.sflag [#allocation3], 1
    %16 = vsyncpa %s15, 0
    loop: start=0, step=1, limit=4
    $region2: #{tpu_custom_call.1} parent=1 // loop_pre_header
      _
    $region3: #{tpu_custom_call.1} parent=1 // loop_header
      %s18 = sphi 0, %s22
      %p19 = scmp.ge.s32.totalorder %s18, 4
      %s28 = sphi 0, %s30
      %s31 = sphi 0, %s28
      %s32 = sphi 0, %s31
      %s48 = sphi 0, %s32
      %s52 = sphi 0, %s52
      %s54 = sphi 0, %s52
      %s55 = sphi 0, %s54
      %s69 = sphi 0, %s55
      %s73 = sphi 0, %s73
      %s75 = sphi 0, %s73
      %s76 = sphi 0, %s75
      %s90 = sphi 0, %s76
      %s94 = sphi 0, %s94
      %s96 = sphi 0, %s94
      %s97 = sphi 0, %s96
      %s111 = sphi 0, %s97
      %s115 = sphi 0, %s115
      %s117 = sphi 0, %s115
      %s118 = sphi 0, %s117
      %s132 = sphi 0, %s118
      %s136 = sphi 0, %s136
      %s138 = sphi 0, %s136
      %s139 = sphi 0, %s138
      %s153 = sphi 0, %s139
      %s157 = sphi 0, %s157
      %s159 = sphi 0, %s157
      %s160 = sphi 0, %s159
      %s174 = sphi 0, %s160
      %s178 = sphi 0, %s178
      %s180 = sphi 0, %s178
      %s181 = sphi 0, %s180
      %s195 = sphi 0, %s181
      %s199 = sphi 0, %s199
      %s201 = sphi 0, %s199
      %s202 = sphi 0, %s201
      %s216 = sphi 0, %s202
      %s222 = sphi 0, %s224
      %s225 = sphi 0, %s222
      %s226 = sphi 0, %s225
      %s242 = sphi 0, %s226
    $region4: #{tpu_custom_call.1} parent=1 // loop_header_branch
      %21 = sbr.rel (%p19) target = $region8
    $region5: #{tpu_custom_call.1} parent=1 // loop_body
      %s23 = ssub.s32 %s18, 1
      %s24 = ssub.s32 %s18, 2
      %s25 = sadd.s32 %s18, 1
      %s26 = ssub.s32 %s18, %s25
      %p27 = scmp.eq.s32.totalorder %s26, 0
      %s29 = sadd.s32 %s28, 1
      %s30 = scalar_select %p27, %s28, %s29
      %p33 = pneg %p27
      %p34 = scmp.eq.s32.totalorder %s18, 1
      %p35 = por %p33, %p34
      %p36 = scmp.ne.s32.totalorder %s28, %s31
      %p37 = scmp.eq.s32.totalorder %s18, 0
      %p38 = por %p36, %p37
      %p39 = scmp.ne.s32.totalorder %s28, %s31
      %p40 = scmp.eq.s32.totalorder %s23, 1
      %p41 = por %p39, %p40
      %p42 = scmp.ne.s32.totalorder %s31, %s32
      %p43 = scmp.eq.s32.totalorder %s23, 0
      %p44 = por %p42, %p43
      %p45 = scmp.ne.s32.totalorder %s31, %s32
      %p46 = scmp.eq.s32.totalorder %s24, 1
      %p47 = por %p45, %p46
      %p49 = scmp.ne.s32.totalorder %s32, %s48
      %p50 = scmp.eq.s32.totalorder %s24, 0
      %p51 = por %p49, %p50
      %s53 = sadd.s32 %s52, 1
      %p56 = scmp.eq.s32.totalorder %s18, 1
      %p57 = scmp.ne.s32.totalorder %s52, %s54
      %p58 = scmp.eq.s32.totalorder %s18, 0
      %p59 = por %p57, %p58
      %p60 = scmp.ne.s32.totalorder %s52, %s54
      %p61 = scmp.eq.s32.totalorder %s23, 1
      %p62 = por %p60, %p61
      %p63 = scmp.ne.s32.totalorder %s54, %s55
      %p64 = scmp.eq.s32.totalorder %s23, 0
      %p65 = por %p63, %p64
      %p66 = scmp.ne.s32.totalorder %s54, %s55
      %p67 = scmp.eq.s32.totalorder %s24, 1
      %p68 = por %p66, %p67
      %p70 = scmp.ne.s32.totalorder %s55, %s69
      %p71 = scmp.eq.s32.totalorder %s24, 0
      %p72 = por %p70, %p71
      %s74 = sadd.s32 %s73, 1
      %p77 = scmp.eq.s32.totalorder %s18, 1
      %p78 = scmp.ne.s32.totalorder %s73, %s75
      %p79 = scmp.eq.s32.totalorder %s18, 0
      %p80 = por %p78, %p79
      %p81 = scmp.ne.s32.totalorder %s73, %s75
      %p82 = scmp.eq.s32.totalorder %s23, 1
      %p83 = por %p81, %p82
      %p84 = scmp.ne.s32.totalorder %s75, %s76
      %p85 = scmp.eq.s32.totalorder %s23, 0
      %p86 = por %p84, %p85
      %p87 = scmp.ne.s32.totalorder %s75, %s76
      %p88 = scmp.eq.s32.totalorder %s24, 1
      %p89 = por %p87, %p88
      %p91 = scmp.ne.s32.totalorder %s76, %s90
      %p92 = scmp.eq.s32.totalorder %s24, 0
      %p93 = por %p91, %p92
      %s95 = sadd.s32 %s94, 1
      %p98 = scmp.eq.s32.totalorder %s18, 1
      %p99 = scmp.ne.s32.totalorder %s94, %s96
      %p100 = scmp.eq.s32.totalorder %s18, 0
      %p101 = por %p99, %p100
      %p102 = scmp.ne.s32.totalorder %s94, %s96
      %p103 = scmp.eq.s32.totalorder %s23, 1
      %p104 = por %p102, %p103
      %p105 = scmp.ne.s32.totalorder %s96, %s97
      %p106 = scmp.eq.s32.totalorder %s23, 0
      %p107 = por %p105, %p106
      %p108 = scmp.ne.s32.totalorder %s96, %s97
      %p109 = scmp.eq.s32.totalorder %s24, 1
      %p110 = por %p108, %p109
      %p112 = scmp.ne.s32.totalorder %s97, %s111
      %p113 = scmp.eq.s32.totalorder %s24, 0
      %p114 = por %p112, %p113
      %s116 = sadd.s32 %s115, 1
      %p119 = scmp.eq.s32.totalorder %s18, 1
      %p120 = scmp.ne.s32.totalorder %s115, %s117
      %p121 = scmp.eq.s32.totalorder %s18, 0
      %p122 = por %p120, %p121
      %p123 = scmp.ne.s32.totalorder %s115, %s117
      %p124 = scmp.eq.s32.totalorder %s23, 1
      %p125 = por %p123, %p124
      %p126 = scmp.ne.s32.totalorder %s117, %s118
      %p127 = scmp.eq.s32.totalorder %s23, 0
      %p128 = por %p126, %p127
      %p129 = scmp.ne.s32.totalorder %s117, %s118
      %p130 = scmp.eq.s32.totalorder %s24, 1
      %p131 = por %p129, %p130
      %p133 = scmp.ne.s32.totalorder %s118, %s132
      %p134 = scmp.eq.s32.totalorder %s24, 0
      %p135 = por %p133, %p134
      %s137 = sadd.s32 %s136, 1
      %p140 = scmp.eq.s32.totalorder %s18, 1
      %p141 = scmp.ne.s32.totalorder %s136, %s138
      %p142 = scmp.eq.s32.totalorder %s18, 0
      %p143 = por %p141, %p142
      %p144 = scmp.ne.s32.totalorder %s136, %s138
      %p145 = scmp.eq.s32.totalorder %s23, 1
      %p146 = por %p144, %p145
      %p147 = scmp.ne.s32.totalorder %s138, %s139
      %p148 = scmp.eq.s32.totalorder %s23, 0
      %p149 = por %p147, %p148
      %p150 = scmp.ne.s32.totalorder %s138, %s139
      %p151 = scmp.eq.s32.totalorder %s24, 1
      %p152 = por %p150, %p151
      %p154 = scmp.ne.s32.totalorder %s139, %s153
      %p155 = scmp.eq.s32.totalorder %s24, 0
      %p156 = por %p154, %p155
      %s158 = sadd.s32 %s157, 1
      %p161 = scmp.eq.s32.totalorder %s18, 1
      %p162 = scmp.ne.s32.totalorder %s157, %s159
      %p163 = scmp.eq.s32.totalorder %s18, 0
      %p164 = por %p162, %p163
      %p165 = scmp.ne.s32.totalorder %s157, %s159
      %p166 = scmp.eq.s32.totalorder %s23, 1
      %p167 = por %p165, %p166
      %p168 = scmp.ne.s32.totalorder %s159, %s160
      %p169 = scmp.eq.s32.totalorder %s23, 0
      %p170 = por %p168, %p169
      %p171 = scmp.ne.s32.totalorder %s159, %s160
      %p172 = scmp.eq.s32.totalorder %s24, 1
      %p173 = por %p171, %p172
      %p175 = scmp.ne.s32.totalorder %s160, %s174
      %p176 = scmp.eq.s32.totalorder %s24, 0
      %p177 = por %p175, %p176
      %s179 = sadd.s32 %s178, 1
      %p182 = scmp.eq.s32.totalorder %s18, 1
      %p183 = scmp.ne.s32.totalorder %s178, %s180
      %p184 = scmp.eq.s32.totalorder %s18, 0
      %p185 = por %p183, %p184
      %p186 = scmp.ne.s32.totalorder %s178, %s180
      %p187 = scmp.eq.s32.totalorder %s23, 1
      %p188 = por %p186, %p187
      %p189 = scmp.ne.s32.totalorder %s180, %s181
      %p190 = scmp.eq.s32.totalorder %s23, 0
      %p191 = por %p189, %p190
      %p192 = scmp.ne.s32.totalorder %s180, %s181
      %p193 = scmp.eq.s32.totalorder %s24, 1
      %p194 = por %p192, %p193
      %p196 = scmp.ne.s32.totalorder %s181, %s195
      %p197 = scmp.eq.s32.totalorder %s24, 0
      %p198 = por %p196, %p197
      %s200 = sadd.s32 %s199, 1
      %p203 = scmp.eq.s32.totalorder %s18, 1
      %p204 = scmp.ne.s32.totalorder %s199, %s201
      %p205 = scmp.eq.s32.totalorder %s18, 0
      %p206 = por %p204, %p205
      %p207 = scmp.ne.s32.totalorder %s199, %s201
      %p208 = scmp.eq.s32.totalorder %s23, 1
      %p209 = por %p207, %p208
      %p210 = scmp.ne.s32.totalorder %s201, %s202
      %p211 = scmp.eq.s32.totalorder %s23, 0
      %p212 = por %p210, %p211
      %p213 = scmp.ne.s32.totalorder %s201, %s202
      %p214 = scmp.eq.s32.totalorder %s24, 1
      %p215 = por %p213, %p214
      %p217 = scmp.ne.s32.totalorder %s202, %s216
      %p218 = scmp.eq.s32.totalorder %s24, 0
      %p219 = por %p217, %p218
      %s220 = ssub.s32 %s18, %s25
      %p221 = scmp.eq.s32.totalorder %s220, 0
      %s223 = sadd.s32 %s222, 1
      %s224 = scalar_select %p221, %s222, %s223
      %p227 = pneg %p221
      %p228 = scmp.eq.s32.totalorder %s18, 1
      %p229 = por %p227, %p228
      %p230 = scmp.ne.s32.totalorder %s222, %s225
      %p231 = scmp.eq.s32.totalorder %s18, 0
      %p232 = por %p230, %p231
      %p233 = scmp.ne.s32.totalorder %s222, %s225
      %p234 = scmp.eq.s32.totalorder %s23, 1
      %p235 = por %p233, %p234
      %p236 = scmp.ne.s32.totalorder %s225, %s226
      %p237 = scmp.eq.s32.totalorder %s23, 0
      %p238 = por %p236, %p237
      %p239 = scmp.ne.s32.totalorder %s225, %s226
      %p240 = scmp.eq.s32.totalorder %s24, 1
      %p241 = por %p239, %p240
      %p243 = scmp.ne.s32.totalorder %s226, %s242
      %p244 = scmp.eq.s32.totalorder %s24, 0
      %p245 = por %p243, %p244
      %p246 = scmp.le.s32.totalorder 1, %s18
      %p247 = scmp.lt.s32.totalorder %s18, 3
      %p248 = pnand %p246, %p247
      %p249 = pneg %p248
      // Predicated region
      $region9: #{tpu_custom_call.1} parent=5 // pred_check
        _
      $region10: #{tpu_custom_call.1} parent=5 // pred_check_branch
        %251 = sbr.rel (%p248) target = $region12
      $region11: #{tpu_custom_call.1} parent=5 // pred_region
        %s252 = ssub.s32 %s18, 1
        // Predicated region
        $region13: #{tpu_custom_call.1} parent=11 // pred_check
          %p253 = pneg %p65
        $region14: #{tpu_custom_call.1} parent=11 // pred_check_branch
          %255 = sbr.rel (%p253) target = $region16
        $region15: #{tpu_custom_call.1} parent=11 // pred_region
          _
        $region16: #{tpu_custom_call.1} parent=11 // pred_fallthru
          _
        // Predicated region
        $region17: #{tpu_custom_call.1} parent=11 // pred_check
          %p256 = pneg %p86
        $region18: #{tpu_custom_call.1} parent=11 // pred_check_branch
          %258 = sbr.rel (%p256) target = $region20
        $region19: #{tpu_custom_call.1} parent=11 // pred_region
          _
        $region20: #{tpu_custom_call.1} parent=11 // pred_fallthru
          _
        // Predicated region
        $region21: #{tpu_custom_call.1} parent=11 // pred_check
          %p259 = pneg %p107
        $region22: #{tpu_custom_call.1} parent=11 // pred_check_branch
          %261 = sbr.rel (%p259) target = $region24
        $region23: #{tpu_custom_call.1} parent=11 // pred_region
          _
        $region24: #{tpu_custom_call.1} parent=11 // pred_fallthru
          _
        // Predicated region
        $region25: #{tpu_custom_call.1} parent=11 // pred_check
          %p262 = pneg %p128
        $region26: #{tpu_custom_call.1} parent=11 // pred_check_branch
          %264 = sbr.rel (%p262) target = $region28
        $region27: #{tpu_custom_call.1} parent=11 // pred_region
          _
        $region28: #{tpu_custom_call.1} parent=11 // pred_fallthru
          _
        // Predicated region
        $region29: #{tpu_custom_call.1} parent=11 // pred_check
          %p265 = pneg %p149
        $region30: #{tpu_custom_call.1} parent=11 // pred_check_branch
          %267 = sbr.rel (%p265) target = $region32
        $region31: #{tpu_custom_call.1} parent=11 // pred_region
          _
        $region32: #{tpu_custom_call.1} parent=11 // pred_fallthru
          _
        // Predicated region
        $region33: #{tpu_custom_call.1} parent=11 // pred_check
          %p268 = pneg %p170
        $region34: #{tpu_custom_call.1} parent=11 // pred_check_branch
          %270 = sbr.rel (%p268) target = $region36
        $region35: #{tpu_custom_call.1} parent=11 // pred_region
          _
        $region36: #{tpu_custom_call.1} parent=11 // pred_fallthru
          _
        // Predicated region
        $region37: #{tpu_custom_call.1} parent=11 // pred_check
          %p271 = pneg %p191
        $region38: #{tpu_custom_call.1} parent=11 // pred_check_branch
          %273 = sbr.rel (%p271) target = $region40
        $region39: #{tpu_custom_call.1} parent=11 // pred_region
          _
        $region40: #{tpu_custom_call.1} parent=11 // pred_fallthru
          _
        // Predicated region
        $region41: #{tpu_custom_call.1} parent=11 // pred_check
          %p274 = pneg %p212
        $region42: #{tpu_custom_call.1} parent=11 // pred_check_branch
          %276 = sbr.rel (%p274) target = $region44
        $region43: #{tpu_custom_call.1} parent=11 // pred_region
          _
        $region44: #{tpu_custom_call.1} parent=11 // pred_fallthru
          _
      $region12: #{tpu_custom_call.1} parent=5 // pred_fallthru
        _
      %p277 = scmp.lt.s32.totalorder %s18, 2
      // Predicated region
      $region45: #{tpu_custom_call.1} parent=5 // pred_check
        %p278 = pneg %p277
      $region46: #{tpu_custom_call.1} parent=5 // pred_check_branch
        %280 = sbr.rel (%p278) target = $region48
      $region47: #{tpu_custom_call.1} parent=5 // pred_region
        // Predicated region
        $region49: #{tpu_custom_call.1} parent=47 // pred_check
          %p281 = pneg %p38
        $region50: #{tpu_custom_call.1} parent=47 // pred_check_branch
          %283 = sbr.rel (%p281) target = $region52
        $region51: #{tpu_custom_call.1} parent=47 // pred_region
          %p284 = scmp.lt.s32.totalorder %s18, 1
          %s285 = scalar_select %p284, %s18, 1
          %s286 = smul.addr %s285, 2
          %s287 = smul.addr %s286, 4
          %s288 = scalar_lea.vmem %s0, %s287
        $region52: #{tpu_custom_call.1} parent=47 // pred_fallthru
          _
      $region48: #{tpu_custom_call.1} parent=5 // pred_fallthru
        _
      %p289 = scmp.le.s32.totalorder 1, %s18
      %p290 = scmp.lt.s32.totalorder %s18, 3
      %p291 = pnand %p289, %p290
      %p292 = pneg %p291
      // Predicated region
      $region53: #{tpu_custom_call.1} parent=5 // pred_check
        _
      $region54: #{tpu_custom_call.1} parent=5 // pred_check_branch
        %294 = sbr.rel (%p291) target = $region56
      $region55: #{tpu_custom_call.1} parent=5 // pred_region
        %s295 = ssub.s32 %s18, 1
        %p296 = scmp.lt.s32.totalorder %s23, 1
        %s297 = scalar_select %p296, %s23, 1
        %s298 = smul.addr %s297, 2
        %s299 = smul.addr %s298, 4
        %s300 = scalar_lea.vmem %s0, %s299
        %p301 = pneg %p44
        %p302 = pneg %p41
        %p303 = pneg %p65
        %p304 = pneg %p62
        %p305 = pneg %p86
        %p306 = pneg %p83
        %p307 = pneg %p107
        %p308 = pneg %p104
        %p309 = pneg %p128
        %p310 = pneg %p125
        %p311 = pneg %p149
        %p312 = pneg %p146
        %p313 = pneg %p170
        %p314 = pneg %p167
        %p315 = pneg %p191
        %p316 = pneg %p188
        %p317 = pneg %p212
        %p318 = pneg %p209
        %p319 = pneg %p238
        %p320 = pneg %p235
        %s321 = sand.u32 %s225, 1
        %s322 = scalar_lea.sflag [#allocation3], %s321
        %s323 = sand.u32 %s225, 1
        %s324 = smul.addr %s323, 64
        %s325 = scalar_lea.vmem [#allocation2], %s324
        %p326 = scmp.lt.s32.totalorder %s23, 1
        %s327 = scalar_select %p326, %s23, 1
        %s328 = smul.addr %s327, 2
        %s329 = smul.addr %s328, 4
        %s330 = scalar_lea.vmem %s0, %s329
        %v331 = vld [vmem:[%s330] sm:$0xff]
        %v332 = vld [vmem:[%s1] sm:$0xff]
        %v333 = vld [vmem:[%s1 + $0x8] sm:$0xff]
        %v335 = vlaneseq
        %v336 = vshrl.u32 %v335, 7
        %v337 = vsub.s32 0, %v336
        %v338 = vrot.slane %v331, %v337
        %v339 = vlaneseq
        %v340 = vshrl.u32 %v339, 7
        %v341 = vsub.s32 4, %v340
        %v342 = vrot.slane %v331, %v341
        %v345 = vlaneseq
        %v346 = vshrl.u32 %v345, 7
        %v347 = vsub.s32 0, %v346
        %v348 = vrot.slane %v338, %v347
        %v349 = vlaneseq
        %v350 = vshrl.u32 %v349, 7
        %v351 = vsub.s32 0, %v350
        %v352 = vrot.slane %v342, %v351
        %354 = vset.pattern.permute.xlu0 0
        %355 = vperm.xlu0 %354, %v332
        %v356 = vpop.permute.xlu0 %355
        %359 = vset.pattern.permute.xlu0 0
        %360 = vperm.xlu0 %359, %v333
        %v361 = vpop.permute.xlu0 %360
        %v363 = vmul.f32 %v348, %v356
        %v364 = vmul.f32 %v352, %v356
        %v365 = vmul.f32 %v348, %v361
        %v366 = vmul.f32 %v352, %v361
        %s367 = scalar_lea.vmem %s1, 16
        %v368 = vld [vmem:[%s367] sm:$0xff]
        %v369 = vld [vmem:[%s367 + $0x8] sm:$0xff]
        %v370 = vlaneseq
        %v371 = vshrl.u32 %v370, 7
        %v372 = vsub.s32 1, %v371
        %v373 = vrot.slane %v331, %v372
        %v374 = vlaneseq
        %v375 = vshrl.u32 %v374, 7
        %v376 = vsub.s32 5, %v375
        %v377 = vrot.slane %v331, %v376
        %v380 = vlaneseq
        %v381 = vshrl.u32 %v380, 7
        %v382 = vsub.s32 1, %v381
        %v383 = vrot.slane %v373, %v382
        %v384 = vlaneseq
        %v385 = vshrl.u32 %v384, 7
        %v386 = vsub.s32 1, %v385
        %v387 = vrot.slane %v377, %v386
        %389 = vset.pattern.permute.xlu0 0
        %390 = vperm.xlu0 %389, %v368
        %v391 = vpop.permute.xlu0 %390
        %394 = vset.pattern.permute.xlu0 0
        %395 = vperm.xlu0 %394, %v369
        %v396 = vpop.permute.xlu0 %395
        %v398 = vmul.f32 %v383, %v391
        %v399 = vmul.f32 %v387, %v391
        %v400 = vmul.f32 %v383, %v396
        %v401 = vmul.f32 %v387, %v396
        %v402 = vadd.f32 %v363, %v398
        %v403 = vadd.f32 %v364, %v399
        %v404 = vadd.f32 %v365, %v400
        %v405 = vadd.f32 %v366, %v401
        %s406 = scalar_lea.vmem %s1, 32
        %v407 = vld [vmem:[%s406] sm:$0xff]
        %v408 = vld [vmem:[%s406 + $0x8] sm:$0xff]
        %v409 = vlaneseq
        %v410 = vshrl.u32 %v409, 7
        %v411 = vsub.s32 2, %v410
        %v412 = vrot.slane %v331, %v411
        %v413 = vlaneseq
        %v414 = vshrl.u32 %v413, 7
        %v415 = vsub.s32 6, %v414
        %v416 = vrot.slane %v331, %v415
        %v419 = vlaneseq
        %v420 = vshrl.u32 %v419, 7
        %v421 = vsub.s32 2, %v420
        %v422 = vrot.slane %v412, %v421
        %v423 = vlaneseq
        %v424 = vshrl.u32 %v423, 7
        %v425 = vsub.s32 2, %v424
        %v426 = vrot.slane %v416, %v425
        %428 = vset.pattern.permute.xlu0 0
        %429 = vperm.xlu0 %428, %v407
        %v430 = vpop.permute.xlu0 %429
        %433 = vset.pattern.permute.xlu0 0
        %434 = vperm.xlu0 %433, %v408
        %v435 = vpop.permute.xlu0 %434
        %v437 = vmul.f32 %v422, %v430
        %v438 = vmul.f32 %v426, %v430
        %v439 = vmul.f32 %v422, %v435
        %v440 = vmul.f32 %v426, %v435
        %v441 = vadd.f32 %v402, %v437
        %v442 = vadd.f32 %v403, %v438
        %v443 = vadd.f32 %v404, %v439
        %v444 = vadd.f32 %v405, %v440
        %s445 = scalar_lea.vmem %s1, 48
        %v446 = vld [vmem:[%s445] sm:$0xff]
        %v447 = vld [vmem:[%s445 + $0x8] sm:$0xff]
        %v448 = vlaneseq
        %v449 = vshrl.u32 %v448, 7
        %v450 = vsub.s32 3, %v449
        %v451 = vrot.slane %v331, %v450
        %v452 = vlaneseq
        %v453 = vshrl.u32 %v452, 7
        %v454 = vsub.s32 7, %v453
        %v455 = vrot.slane %v331, %v454
        %v458 = vlaneseq
        %v459 = vshrl.u32 %v458, 7
        %v460 = vsub.s32 3, %v459
        %v461 = vrot.slane %v451, %v460
        %v462 = vlaneseq
        %v463 = vshrl.u32 %v462, 7
        %v464 = vsub.s32 3, %v463
        %v465 = vrot.slane %v455, %v464
        %467 = vset.pattern.permute.xlu0 0
        %468 = vperm.xlu0 %467, %v446
        %v469 = vpop.permute.xlu0 %468
        %472 = vset.pattern.permute.xlu0 0
        %473 = vperm.xlu0 %472, %v447
        %v474 = vpop.permute.xlu0 %473
        %v476 = vmul.f32 %v461, %v469
        %v477 = vmul.f32 %v465, %v469
        %v478 = vmul.f32 %v461, %v474
        %v479 = vmul.f32 %v465, %v474
        %v480 = vadd.f32 %v441, %v476
        %v481 = vadd.f32 %v442, %v477
        %v482 = vadd.f32 %v443, %v478
        %v483 = vadd.f32 %v444, %v479
        %v484 = vld [vmem:[%s2] sm:$0xff]
        %v485 = vld [vmem:[%s2 + $0x8] sm:$0xff]
        %487 = vset.pattern.permute.xlu0 0
        %488 = vperm.xlu0 %487, %v484
        %v489 = vpop.permute.xlu0 %488
        %492 = vset.pattern.permute.xlu0 0
        %493 = vperm.xlu0 %492, %v485
        %v494 = vpop.permute.xlu0 %493
        %v496 = vmul.f32 %v480, %v489
        %v497 = vmul.f32 %v481, %v489
        %v498 = vmul.f32 %v482, %v494
        %v499 = vmul.f32 %v483, %v494
        %v500 = vld [vmem:[%s3] sm:$0xff]
        %v501 = vld [vmem:[%s3 + $0x8] sm:$0xff]
        %503 = vset.pattern.permute.xlu0 0
        %504 = vperm.xlu0 %503, %v500
        %v505 = vpop.permute.xlu0 %504
        %508 = vset.pattern.permute.xlu0 0
        %509 = vperm.xlu0 %508, %v501
        %v510 = vpop.permute.xlu0 %509
        %v512 = vadd.f32 %v496, %v505
        %v513 = vadd.f32 %v497, %v505
        %v514 = vadd.f32 %v498, %v510
        %v515 = vadd.f32 %v499, %v510
        %v516 = vmax.f32 %v512, 0.0
        %v517 = vmax.f32 %v513, 0.0
        %v518 = vmax.f32 %v514, 0.0
        %v519 = vmax.f32 %v515, 0.0
        %v520 = vld [vmem:[%s7] sm:$0x3]
        %v521 = vld [vmem:[%s8] sm:$0x3]
        %vm522 = vcmp.ge.s32.totalorder %v520, 1
        %vm523 = vcmp.le.s32.totalorder %v520, 14
        %vm524 = vcmp.ge.s32.totalorder %v521, 1
        %vm525 = vcmp.le.s32.totalorder %v521, 14
        %526 = vrot.lane.b32.xlu0 %v516, 17
        %v527 = vpop.permute.xlu0 %526
        %528 = vrot.lane.b32.xlu0 %v518, 17
        %v529 = vpop.permute.xlu0 %528
        %530 = vrot.lane.b32.xlu0 %v517, 17
        %v531 = vpop.permute.xlu0 %530
        %532 = vrot.lane.b32.xlu0 %v519, 17
        %v533 = vpop.permute.xlu0 %532
        %v534 = vlaneseq
        %v535 = vand.u32 %v534, 127
        %vm536 = vcmp.lt.s32.totalorder %v535, 17
        %v537 = vsel %vm536, %v527, %v531
        %v538 = vsel %vm536, %v529, %v533
        %v539 = vsel %vm536, %v531, %v527
        %v540 = vsel %vm536, %v533, %v529
        %vm541 = vmand %vm522, %vm524
        %v542 = vsel %vm541, 1, 0
        %v543 = vlaneseq
        %v544 = vshrl.u32 %v543, 7
        %v545 = vsub.s32 0, %v544
        %v546 = vrot.slane %v542, %v545
        %v547 = vlaneseq
        %v548 = vshrl.u32 %v547, 7
        %v549 = vsub.s32 1, %v548
        %v550 = vrot.slane %v542, %v549
        %vm551 = vcmp.eq.s32.totalorder %v546, 1
        %vm552 = vcmp.eq.s32.totalorder %v550, 1
        %v553 = vsel %vm551, %v539, 0.0
        %v554 = vsel %vm552, %v537, 0.0
        %v555 = vsel %vm551, %v540, 0.0
        %v556 = vsel %vm552, %v538, 0.0
        %v557 = vld [vmem:[%s4] sm:$0xff]
        %v558 = vld [vmem:[%s4 + $0x8] sm:$0xff]
        %560 = vset.pattern.permute.xlu0 0
        %561 = vperm.xlu0 %560, %v557
        %v562 = vpop.permute.xlu0 %561
        %565 = vset.pattern.permute.xlu0 0
        %566 = vperm.xlu0 %565, %v558
        %v567 = vpop.permute.xlu0 %566
        %v569 = vmul.f32 %v553, %v562
        %v570 = vmul.f32 %v554, %v562
        %v571 = vmul.f32 %v555, %v567
        %v572 = vmul.f32 %v556, %v567
        %573 = vrot.lane.b32.xlu0 %v516, 16
        %v574 = vpop.permute.xlu0 %573
        %575 = vrot.lane.b32.xlu0 %v518, 16
        %v576 = vpop.permute.xlu0 %575
        %577 = vrot.lane.b32.xlu0 %v517, 16
        %v578 = vpop.permute.xlu0 %577
        %579 = vrot.lane.b32.xlu0 %v519, 16
        %v580 = vpop.permute.xlu0 %579
        %vm581 = vcmp.lt.s32.totalorder %v535, 16
        %v582 = vsel %vm581, %v574, %v578
        %v583 = vsel %vm581, %v576, %v580
        %v584 = vsel %vm581, %v578, %v574
        %v585 = vsel %vm581, %v580, %v576
        %v586 = vsel %vm522, 1, 0
        %v587 = vlaneseq
        %v588 = vshrl.u32 %v587, 7
        %v589 = vsub.s32 0, %v588
        %v590 = vrot.slane %v586, %v589
        %v591 = vlaneseq
        %v592 = vshrl.u32 %v591, 7
        %v593 = vsub.s32 1, %v592
        %v594 = vrot.slane %v586, %v593
        %vm595 = vcmp.eq.s32.totalorder %v590, 1
        %vm596 = vcmp.eq.s32.totalorder %v594, 1
        %v597 = vsel %vm595, %v584, 0.0
        %v598 = vsel %vm596, %v582, 0.0
        %v599 = vsel %vm595, %v585, 0.0
        %v600 = vsel %vm596, %v583, 0.0
        %s601 = scalar_lea.vmem %s4, 16
        %v602 = vld [vmem:[%s601] sm:$0xff]
        %v603 = vld [vmem:[%s601 + $0x8] sm:$0xff]
        %605 = vset.pattern.permute.xlu0 0
        %606 = vperm.xlu0 %605, %v602
        %v607 = vpop.permute.xlu0 %606
        %610 = vset.pattern.permute.xlu0 0
        %611 = vperm.xlu0 %610, %v603
        %v612 = vpop.permute.xlu0 %611
        %v614 = vmul.f32 %v597, %v607
        %v615 = vmul.f32 %v598, %v607
        %v616 = vmul.f32 %v599, %v612
        %v617 = vmul.f32 %v600, %v612
        %v618 = vadd.f32 %v569, %v614
        %v619 = vadd.f32 %v570, %v615
        %v620 = vadd.f32 %v571, %v616
        %v621 = vadd.f32 %v572, %v617
        %622 = vrot.lane.b32.xlu0 %v516, 15
        %v623 = vpop.permute.xlu0 %622
        %624 = vrot.lane.b32.xlu0 %v518, 15
        %v625 = vpop.permute.xlu0 %624
        %626 = vrot.lane.b32.xlu0 %v517, 15
        %v627 = vpop.permute.xlu0 %626
        %628 = vrot.lane.b32.xlu0 %v519, 15
        %v629 = vpop.permute.xlu0 %628
        %vm630 = vcmp.lt.s32.totalorder %v535, 15
        %v631 = vsel %vm630, %v623, %v627
        %v632 = vsel %vm630, %v625, %v629
        %v633 = vsel %vm630, %v627, %v623
        %v634 = vsel %vm630, %v629, %v625
        %vm635 = vmand %vm522, %vm525
        %v636 = vsel %vm635, 1, 0
        %v637 = vlaneseq
        %v638 = vshrl.u32 %v637, 7
        %v639 = vsub.s32 0, %v638
        %v640 = vrot.slane %v636, %v639
        %v641 = vlaneseq
        %v642 = vshrl.u32 %v641, 7
        %v643 = vsub.s32 1, %v642
        %v644 = vrot.slane %v636, %v643
        %vm645 = vcmp.eq.s32.totalorder %v640, 1
        %vm646 = vcmp.eq.s32.totalorder %v644, 1
        %v647 = vsel %vm645, %v633, 0.0
        %v648 = vsel %vm646, %v631, 0.0
        %v649 = vsel %vm645, %v634, 0.0
        %v650 = vsel %vm646, %v632, 0.0
        %s651 = scalar_lea.vmem %s4, 32
        %v652 = vld [vmem:[%s651] sm:$0xff]
        %v653 = vld [vmem:[%s651 + $0x8] sm:$0xff]
        %655 = vset.pattern.permute.xlu0 0
        %656 = vperm.xlu0 %655, %v652
        %v657 = vpop.permute.xlu0 %656
        %660 = vset.pattern.permute.xlu0 0
        %661 = vperm.xlu0 %660, %v653
        %v662 = vpop.permute.xlu0 %661
        %v664 = vmul.f32 %v647, %v657
        %v665 = vmul.f32 %v648, %v657
        %v666 = vmul.f32 %v649, %v662
        %v667 = vmul.f32 %v650, %v662
        %v668 = vadd.f32 %v618, %v664
        %v669 = vadd.f32 %v619, %v665
        %v670 = vadd.f32 %v620, %v666
        %v671 = vadd.f32 %v621, %v667
        %672 = vrot.lane.b32.xlu0 %v516, 1
        %v673 = vpop.permute.xlu0 %672
        %674 = vrot.lane.b32.xlu0 %v518, 1
        %v675 = vpop.permute.xlu0 %674
        %676 = vrot.lane.b32.xlu0 %v517, 1
        %v677 = vpop.permute.xlu0 %676
        %678 = vrot.lane.b32.xlu0 %v519, 1
        %v679 = vpop.permute.xlu0 %678
        %vm680 = vcmp.lt.s32.totalorder %v535, 1
        %v681 = vsel %vm680, %v673, %v677
        %v682 = vsel %vm680, %v675, %v679
        %v683 = vsel %vm680, %v677, %v673
        %v684 = vsel %vm680, %v679, %v675
        %v685 = vsel %vm524, 1, 0
        %v686 = vlaneseq
        %v687 = vshrl.u32 %v686, 7
        %v688 = vsub.s32 0, %v687
        %v689 = vrot.slane %v685, %v688
        %v690 = vlaneseq
        %v691 = vshrl.u32 %v690, 7
        %v692 = vsub.s32 1, %v691
        %v693 = vrot.slane %v685, %v692
        %vm694 = vcmp.eq.s32.totalorder %v689, 1
        %vm695 = vcmp.eq.s32.totalorder %v693, 1
        %v696 = vsel %vm694, %v683, 0.0
        %v697 = vsel %vm695, %v681, 0.0
        %v698 = vsel %vm694, %v684, 0.0
        %v699 = vsel %vm695, %v682, 0.0
        %s700 = scalar_lea.vmem %s4, 48
        %v701 = vld [vmem:[%s700] sm:$0xff]
        %v702 = vld [vmem:[%s700 + $0x8] sm:$0xff]
        %704 = vset.pattern.permute.xlu0 0
        %705 = vperm.xlu0 %704, %v701
        %v706 = vpop.permute.xlu0 %705
        %709 = vset.pattern.permute.xlu0 0
        %710 = vperm.xlu0 %709, %v702
        %v711 = vpop.permute.xlu0 %710
        %v713 = vmul.f32 %v696, %v706
        %v714 = vmul.f32 %v697, %v706
        %v715 = vmul.f32 %v698, %v711
        %v716 = vmul.f32 %v699, %v711
        %v717 = vadd.f32 %v668, %v713
        %v718 = vadd.f32 %v669, %v714
        %v719 = vadd.f32 %v670, %v715
        %v720 = vadd.f32 %v671, %v716
        %s721 = scalar_lea.vmem %s4, 64
        %v722 = vld [vmem:[%s721] sm:$0xff]
        %v723 = vld [vmem:[%s721 + $0x8] sm:$0xff]
        %725 = vset.pattern.permute.xlu0 0
        %726 = vperm.xlu0 %725, %v722
        %v727 = vpop.permute.xlu0 %726
        %730 = vset.pattern.permute.xlu0 0
        %731 = vperm.xlu0 %730, %v723
        %v732 = vpop.permute.xlu0 %731
        %v734 = vmul.f32 %v516, %v727
        %v735 = vmul.f32 %v517, %v727
        %v736 = vmul.f32 %v518, %v732
        %v737 = vmul.f32 %v519, %v732
        %v738 = vadd.f32 %v717, %v734
        %v739 = vadd.f32 %v718, %v735
        %v740 = vadd.f32 %v719, %v736
        %v741 = vadd.f32 %v720, %v737
        %742 = vrot.lane.b32.xlu0 %v516, 127
        %v743 = vpop.permute.xlu0 %742
        %744 = vrot.lane.b32.xlu0 %v518, 127
        %v745 = vpop.permute.xlu0 %744
        %746 = vrot.lane.b32.xlu0 %v517, 127
        %v747 = vpop.permute.xlu0 %746
        %748 = vrot.lane.b32.xlu0 %v519, 127
        %v749 = vpop.permute.xlu0 %748
        %vm750 = vcmp.lt.s32.totalorder %v535, 127
        %v751 = vsel %vm750, %v743, %v747
        %v752 = vsel %vm750, %v745, %v749
        %v753 = vsel %vm750, %v747, %v743
        %v754 = vsel %vm750, %v749, %v745
        %v755 = vsel %vm525, 1, 0
        %v756 = vlaneseq
        %v757 = vshrl.u32 %v756, 7
        %v758 = vsub.s32 0, %v757
        %v759 = vrot.slane %v755, %v758
        %v760 = vlaneseq
        %v761 = vshrl.u32 %v760, 7
        %v762 = vsub.s32 1, %v761
        %v763 = vrot.slane %v755, %v762
        %vm764 = vcmp.eq.s32.totalorder %v759, 1
        %vm765 = vcmp.eq.s32.totalorder %v763, 1
        %v766 = vsel %vm764, %v751, 0.0
        %v767 = vsel %vm765, %v753, 0.0
        %v768 = vsel %vm764, %v752, 0.0
        %v769 = vsel %vm765, %v754, 0.0
        %s770 = scalar_lea.vmem %s4, 80
        %v771 = vld [vmem:[%s770] sm:$0xff]
        %v772 = vld [vmem:[%s770 + $0x8] sm:$0xff]
        %774 = vset.pattern.permute.xlu0 0
        %775 = vperm.xlu0 %774, %v771
        %v776 = vpop.permute.xlu0 %775
        %779 = vset.pattern.permute.xlu0 0
        %780 = vperm.xlu0 %779, %v772
        %v781 = vpop.permute.xlu0 %780
        %v783 = vmul.f32 %v766, %v776
        %v784 = vmul.f32 %v767, %v776
        %v785 = vmul.f32 %v768, %v781
        %v786 = vmul.f32 %v769, %v781
        %v787 = vadd.f32 %v738, %v783
        %v788 = vadd.f32 %v739, %v784
        %v789 = vadd.f32 %v740, %v785
        %v790 = vadd.f32 %v741, %v786
        %791 = vrot.lane.b32.xlu0 %v516, 113
        %v792 = vpop.permute.xlu0 %791
        %793 = vrot.lane.b32.xlu0 %v518, 113
        %v794 = vpop.permute.xlu0 %793
        %795 = vrot.lane.b32.xlu0 %v517, 113
        %v796 = vpop.permute.xlu0 %795
        %797 = vrot.lane.b32.xlu0 %v519, 113
        %v798 = vpop.permute.xlu0 %797
        %vm799 = vcmp.lt.s32.totalorder %v535, 113
        %v800 = vsel %vm799, %v792, %v796
        %v801 = vsel %vm799, %v794, %v798
        %v802 = vsel %vm799, %v796, %v792
        %v803 = vsel %vm799, %v798, %v794
        %vm804 = vmand %vm523, %vm524
        %v805 = vsel %vm804, 1, 0
        %v806 = vlaneseq
        %v807 = vshrl.u32 %v806, 7
        %v808 = vsub.s32 0, %v807
        %v809 = vrot.slane %v805, %v808
        %v810 = vlaneseq
        %v811 = vshrl.u32 %v810, 7
        %v812 = vsub.s32 1, %v811
        %v813 = vrot.slane %v805, %v812
        %vm814 = vcmp.eq.s32.totalorder %v809, 1
        %vm815 = vcmp.eq.s32.totalorder %v813, 1
        %v816 = vsel %vm814, %v800, 0.0
        %v817 = vsel %vm815, %v802, 0.0
        %v818 = vsel %vm814, %v801, 0.0
        %v819 = vsel %vm815, %v803, 0.0
        %s820 = scalar_lea.vmem %s4, 96
        %v821 = vld [vmem:[%s820] sm:$0xff]
        %v822 = vld [vmem:[%s820 + $0x8] sm:$0xff]
        %824 = vset.pattern.permute.xlu0 0
        %825 = vperm.xlu0 %824, %v821
        %v826 = vpop.permute.xlu0 %825
        %829 = vset.pattern.permute.xlu0 0
        %830 = vperm.xlu0 %829, %v822
        %v831 = vpop.permute.xlu0 %830
        %v833 = vmul.f32 %v816, %v826
        %v834 = vmul.f32 %v817, %v826
        %v835 = vmul.f32 %v818, %v831
        %v836 = vmul.f32 %v819, %v831
        %v837 = vadd.f32 %v787, %v833
        %v838 = vadd.f32 %v788, %v834
        %v839 = vadd.f32 %v789, %v835
        %v840 = vadd.f32 %v790, %v836
        %841 = vrot.lane.b32.xlu0 %v516, 112
        %v842 = vpop.permute.xlu0 %841
        %843 = vrot.lane.b32.xlu0 %v518, 112
        %v844 = vpop.permute.xlu0 %843
        %845 = vrot.lane.b32.xlu0 %v517, 112
        %v846 = vpop.permute.xlu0 %845
        %847 = vrot.lane.b32.xlu0 %v519, 112
        %v848 = vpop.permute.xlu0 %847
        %vm849 = vcmp.lt.s32.totalorder %v535, 112
        %v850 = vsel %vm849, %v842, %v846
        %v851 = vsel %vm849, %v844, %v848
        %v852 = vsel %vm849, %v846, %v842
        %v853 = vsel %vm849, %v848, %v844
        %v854 = vsel %vm523, 1, 0
        %v855 = vlaneseq
        %v856 = vshrl.u32 %v855, 7
        %v857 = vsub.s32 0, %v856
        %v858 = vrot.slane %v854, %v857
        %v859 = vlaneseq
        %v860 = vshrl.u32 %v859, 7
        %v861 = vsub.s32 1, %v860
        %v862 = vrot.slane %v854, %v861
        %vm863 = vcmp.eq.s32.totalorder %v858, 1
        %vm864 = vcmp.eq.s32.totalorder %v862, 1
        %v865 = vsel %vm863, %v850, 0.0
        %v866 = vsel %vm864, %v852, 0.0
        %v867 = vsel %vm863, %v851, 0.0
        %v868 = vsel %vm864, %v853, 0.0
        %s869 = scalar_lea.vmem %s4, 112
        %v870 = vld [vmem:[%s869] sm:$0xff]
        %v871 = vld [vmem:[%s869 + $0x8] sm:$0xff]
        %873 = vset.pattern.permute.xlu0 0
        %874 = vperm.xlu0 %873, %v870
        %v875 = vpop.permute.xlu0 %874
        %878 = vset.pattern.permute.xlu0 0
        %879 = vperm.xlu0 %878, %v871
        %v880 = vpop.permute.xlu0 %879
        %v882 = vmul.f32 %v865, %v875
        %v883 = vmul.f32 %v866, %v875
        %v884 = vmul.f32 %v867, %v880
        %v885 = vmul.f32 %v868, %v880
        %v886 = vadd.f32 %v837, %v882
        %v887 = vadd.f32 %v838, %v883
        %v888 = vadd.f32 %v839, %v884
        %v889 = vadd.f32 %v840, %v885
        %890 = vrot.lane.b32.xlu0 %v516, 111
        %v891 = vpop.permute.xlu0 %890
        %892 = vrot.lane.b32.xlu0 %v518, 111
        %v893 = vpop.permute.xlu0 %892
        %894 = vrot.lane.b32.xlu0 %v517, 111
        %v895 = vpop.permute.xlu0 %894
        %896 = vrot.lane.b32.xlu0 %v519, 111
        %v897 = vpop.permute.xlu0 %896
        %vm898 = vcmp.lt.s32.totalorder %v535, 111
        %v899 = vsel %vm898, %v891, %v895
        %v900 = vsel %vm898, %v893, %v897
        %v901 = vsel %vm898, %v895, %v891
        %v902 = vsel %vm898, %v897, %v893
        %vm903 = vmand %vm523, %vm525
        %v904 = vsel %vm903, 1, 0
        %v905 = vlaneseq
        %v906 = vshrl.u32 %v905, 7
        %v907 = vsub.s32 0, %v906
        %v908 = vrot.slane %v904, %v907
        %v909 = vlaneseq
        %v910 = vshrl.u32 %v909, 7
        %v911 = vsub.s32 1, %v910
        %v912 = vrot.slane %v904, %v911
        %vm913 = vcmp.eq.s32.totalorder %v908, 1
        %vm914 = vcmp.eq.s32.totalorder %v912, 1
        %v915 = vsel %vm913, %v899, 0.0
        %v916 = vsel %vm914, %v901, 0.0
        %v917 = vsel %vm913, %v900, 0.0
        %v918 = vsel %vm914, %v902, 0.0
        %s919 = scalar_lea.vmem %s4, 128
        %v920 = vld [vmem:[%s919] sm:$0xff]
        %v921 = vld [vmem:[%s919 + $0x8] sm:$0xff]
        %923 = vset.pattern.permute.xlu0 0
        %924 = vperm.xlu0 %923, %v920
        %v925 = vpop.permute.xlu0 %924
        %928 = vset.pattern.permute.xlu0 0
        %929 = vperm.xlu0 %928, %v921
        %v930 = vpop.permute.xlu0 %929
        %v932 = vmul.f32 %v915, %v925
        %v933 = vmul.f32 %v916, %v925
        %v934 = vmul.f32 %v917, %v930
        %v935 = vmul.f32 %v918, %v930
        %v936 = vadd.f32 %v886, %v932
        %v937 = vadd.f32 %v887, %v933
        %v938 = vadd.f32 %v888, %v934
        %v939 = vadd.f32 %v889, %v935
        %v940 = vld [vmem:[%s5] sm:$0xff]
        %v941 = vld [vmem:[%s5 + $0x8] sm:$0xff]
        %943 = vset.pattern.permute.xlu0 0
        %944 = vperm.xlu0 %943, %v940
        %v945 = vpop.permute.xlu0 %944
        %948 = vset.pattern.permute.xlu0 0
        %949 = vperm.xlu0 %948, %v941
        %v950 = vpop.permute.xlu0 %949
        %v952 = vmul.f32 %v936, %v945
        %v953 = vmul.f32 %v937, %v945
        %v954 = vmul.f32 %v938, %v950
        %v955 = vmul.f32 %v939, %v950
        %v956 = vld [vmem:[%s6] sm:$0xff]
        %v957 = vld [vmem:[%s6 + $0x8] sm:$0xff]
        %959 = vset.pattern.permute.xlu0 0
        %960 = vperm.xlu0 %959, %v956
        %v961 = vpop.permute.xlu0 %960
        %964 = vset.pattern.permute.xlu0 0
        %965 = vperm.xlu0 %964, %v957
        %v966 = vpop.permute.xlu0 %965
        %v968 = vadd.f32 %v952, %v961
        %v969 = vadd.f32 %v953, %v961
        %v970 = vadd.f32 %v954, %v966
        %v971 = vadd.f32 %v955, %v966
        %v972 = vmax.f32 %v968, 0.0
        %v973 = vmax.f32 %v969, 0.0
        %v974 = vmax.f32 %v970, 0.0
        %v975 = vmax.f32 %v971, 0.0
        %976 = vst [vmem:[%s325] sm:$0xff] %v516
        %977 = vst [vmem:[%s325 + $0x8] sm:$0xff] %v517
        %978 = vst [vmem:[%s325 + $0x10] sm:$0xff] %v518
        %979 = vst [vmem:[%s325 + $0x18] sm:$0xff] %v519
        %980 = vst [vmem:[%s325 + $0x20] sm:$0xff] %v972
        %981 = vst [vmem:[%s325 + $0x28] sm:$0xff] %v973
        %982 = vst [vmem:[%s325 + $0x30] sm:$0xff] %v974
        %983 = vst [vmem:[%s325 + $0x38] sm:$0xff] %v975
        %s984 = sand.u32 %s225, 1
        %s985 = scalar_lea.sflag [#allocation3], %s984
        %s986 = sand.u32 %s225, 1
        %s987 = smul.addr %s986, 64
        %s988 = scalar_lea.vmem [#allocation2], %s987
        // Predicated region
        $region57: #{tpu_custom_call.1} parent=55 // pred_check
          %p989 = pneg %p235
        $region58: #{tpu_custom_call.1} parent=55 // pred_check_branch
          %991 = sbr.rel (%p989) target = $region60
        $region59: #{tpu_custom_call.1} parent=55 // pred_region
          %s993 = ssub.s32 1024, 1024
          %994 = vsyncadd %s985, %s993
          %s995 = smul.addr %s23, 8
          %s996 = smul.addr %s995, 128
          %s997 = scalar_lea.hbm %s9, %s996
          %s998 = sshll.u32 %s988, 4
          %s999 = int_to_ptr.vmem [resolvable:$true] %s998
          %1004 = dma.vmem_to_hbm [thread:$0]  %s999, 1024, %s997, %s985, 256, 256, 16
        $region60: #{tpu_custom_call.1} parent=55 // pred_fallthru
          _
      $region56: #{tpu_custom_call.1} parent=5 // pred_fallthru
        _
      %p1005 = scmp.le.s32.totalorder 2, %s18
      // Predicated region
      $region61: #{tpu_custom_call.1} parent=5 // pred_check
        %p1006 = pneg %p1005
      $region62: #{tpu_custom_call.1} parent=5 // pred_check_branch
        %1008 = sbr.rel (%p1006) target = $region64
      $region63: #{tpu_custom_call.1} parent=5 // pred_region
        %s1009 = ssub.s32 %s18, 2
        // Predicated region
        $region65: #{tpu_custom_call.1} parent=63 // pred_check
          %p1010 = pneg %p241
        $region66: #{tpu_custom_call.1} parent=63 // pred_check_branch
          %1012 = sbr.rel (%p1010) target = $region68
        $region67: #{tpu_custom_call.1} parent=63 // pred_region
          %s1013 = sand.u32 %s226, 1
          %s1014 = scalar_lea.sflag [#allocation3], %s1013
          %s1015 = sand.u32 %s226, 1
          %s1016 = smul.addr %s1015, 64
          %s1017 = scalar_lea.vmem [#allocation2], %s1016
          %1018 = dma.done %s1014, 1024
        $region68: #{tpu_custom_call.1} parent=63 // pred_fallthru
          _
      $region64: #{tpu_custom_call.1} parent=5 // pred_fallthru
        _
    $region6: #{tpu_custom_call.1} parent=1 // loop_footer
      %s22 = sadd.s32 1, %s18
    $region7: #{tpu_custom_call.1} parent=1 // loop_footer_branch
      %17 = sbr.rel target = $region3
    $region8: #{tpu_custom_call.1} parent=1 // loop_exit
      _
    %1019 = vsyncpa [#allocation3], 1
    %s1020 = scalar_lea.sflag [#allocation3], 1
    %1021 = vsyncpa %s1020, 1

</llo_original>
